<compile_context>
chip_gen: v7x
topology: tpu7x:2x2x1
jax: 0.10.0
libtpu: 0.0.40
codegen_flags: <defaults>
</compile_context>

<pallas_src>
import functools

import jax
import jax.numpy as jnp
from jax.experimental import pallas as pl
from jax.experimental.pallas import tpu as pltpu

HIDDEN = 128
N_OUT = 100
N_PAD = 128  # lane-aligned output width


def _round_up(x, m):
    return ((x + m - 1) // m) * m


def _mlp_kernel(x_ref, w1_ref, b1_ref, w2_ref, b2_ref, o_ref):
    # Layer 1: Linear(n_dim -> 128), f32 accumulate on the MXU.
    h = jnp.dot(x_ref[...], w1_ref[...], preferred_element_type=jnp.float32)
    # Bias + ReLU in f32 (VPU); b1 is (1, 128) and broadcasts over the batch tile.
    h = jnp.maximum(h + b1_ref[...], 0.0)
    # Feed the second matmul in the weight dtype (bf16 on v6e/v7x, f32 otherwise).
    h = h.astype(w2_ref.dtype)
    # Layer 2: Linear(128 -> 128 padded), f32 accumulate.
    z = jnp.dot(h, w2_ref[...], preferred_element_type=jnp.float32)
    z = z + b2_ref[...]
    # Sigmoid: exp + reciprocal land on the EUP slot (essentially free here).
    o_ref[...] = jax.nn.sigmoid(z).astype(o_ref.dtype)


@functools.partial(jax.jit, static_argnames=("block_b", "use_bf16"))
def neural_network_year_venue(x, w1, b1, w2, b2, *, block_b=512, use_bf16=False):
    """Forward pass. x: (B, n_dim). w1: (n_dim, 128), w2: (128, 100).

    Returns (B, 100) float32 = sigmoid(relu(x @ w1 + b1) @ w2 + b2).
    """
    B, n_dim = x.shape
    assert w1.shape == (n_dim, HIDDEN)
    assert w2.shape == (HIDDEN, N_OUT)

    # --- Wrapper-side plumbing: lane-pad the output projection to 128. ------
    w2_p = jnp.zeros((HIDDEN, N_PAD), w2.dtype).at[:, :N_OUT].set(w2)
    b2_p = jnp.zeros((1, N_PAD), jnp.float32).at[:, :N_OUT].set(
        b2.astype(jnp.float32).reshape(1, N_OUT))
    b1_p = b1.astype(jnp.float32).reshape(1, HIDDEN)

    # Optional bf16 streams for the matmul inputs (v6e/v7x HBM-traffic halving).
    if use_bf16:
        x_in = x.astype(jnp.bfloat16)
        w1_in = w1.astype(jnp.bfloat16)
        w2_p = w2_p.astype(jnp.bfloat16)
    else:
        x_in = x.astype(jnp.float32)
        w1_in = w1.astype(jnp.float32)
        w2_p = w2_p.astype(jnp.float32)

    # --- Batch tiling: biggest tile that stays comfortably inside VMEM. -----
    x_itemsize = jnp.dtype(x_in.dtype).itemsize
    bytes_per_row = n_dim * x_itemsize + N_PAD * 4          # x tile + out tile
    vmem_budget = 24 << 20                                   # headroom under 32 MiB scoped
    max_tb = max(16, (vmem_budget // (2 * bytes_per_row)) // 16 * 16)  # 2x = double buffer
    TB = int(min(block_b, max_tb, _round_up(B, 16)))

    Bp = _round_up(B, TB)
    if Bp != B:
        x_in = jnp.pad(x_in, ((0, Bp - B), (0, 0)))
    grid = (Bp // TB,)

    # TODO(synk): if n_dim grows very large (>~8-16K), add a K grid axis over
    # n_dim with a VMEM accumulator + pl.when init/finalize instead of loading
    # all of W1 as one block.

    cost = pl.CostEstimate(
        flops=2 * Bp * (n_dim * HIDDEN + HIDDEN * N_PAD),
        transcendentals=Bp * N_PAD,
        bytes_accessed=(x_in.size * x_itemsize
                        + w1_in.size * jnp.dtype(w1_in.dtype).itemsize
                        + w2_p.size * jnp.dtype(w2_p.dtype).itemsize
                        + b1_p.size * 4 + b2_p.size * 4
                        + Bp * N_PAD * 4),
    )

    out_padded = pl.pallas_call(
        _mlp_kernel,
        out_shape=jax.ShapeDtypeStruct((Bp, N_PAD), jnp.float32),
        grid_spec=pltpu.PrefetchScalarGridSpec(
            num_scalar_prefetch=0,
            grid=grid,
            in_specs=[
                pl.BlockSpec((TB, n_dim), lambda i: (i, 0)),        # x: tiled over batch
                pl.BlockSpec((n_dim, HIDDEN), lambda i: (0, 0)),    # W1: VMEM-resident
                pl.BlockSpec((1, HIDDEN), lambda i: (0, 0)),        # b1
                pl.BlockSpec((HIDDEN, N_PAD), lambda i: (0, 0)),    # W2 (padded)
                pl.BlockSpec((1, N_PAD), lambda i: (0, 0)),         # b2 (padded)
            ],
            out_specs=pl.BlockSpec((TB, N_PAD), lambda i: (i, 0)),  # lane-dense output
        ),
        compiler_params=pltpu.CompilerParams(
            dimension_semantics=("parallel",),                       # megacore on v7x
        ),
        cost_estimate=cost,
    )(x_in, w1_in, b1_p, w2_p, b2_p)

    return out_padded[:B, :N_OUT]


def init_params(key, n_dim):
    """Deterministic init matching nn.Linear default: U(-1/sqrt(fan_in), 1/sqrt(fan_in))."""
    k1, k2, k3, k4 = jax.random.split(key, 4)
    bound1 = 1.0 / jnp.sqrt(n_dim)
    bound2 = 1.0 / jnp.sqrt(HIDDEN)
    # Stored as (in, out): equivalent to PyTorch weight (out, in) transposed.
    w1 = jax.random.uniform(k1, (n_dim, HIDDEN), jnp.float32, -bound1, bound1)
    b1 = jax.random.uniform(k2, (HIDDEN,), jnp.float32, -bound1, bound1)
    w2 = jax.random.uniform(k3, (HIDDEN, N_OUT), jnp.float32, -bound2, bound2)
    b2 = jax.random.uniform(k4, (N_OUT,), jnp.float32, -bound2, bound2)
    return w1, b1, w2, b2


if __name__ == "__main__":
    key = jax.random.PRNGKey(0)
    B, n_dim = 8, 32

    kx, kp = jax.random.split(key)
    x = jax.random.normal(kx, (B, n_dim), jnp.float32)
    w1, b1, w2, b2 = init_params(kp, n_dim)

    # Pure-JAX reference (same math as the PyTorch forward).
    ref = jax.nn.sigmoid(jnp.maximum(x @ w1 + b1, 0.0) @ w2 + b2)

    # f32 path: tight tolerance.
    out_f32 = jax.block_until_ready(
        neural_network_year_venue(x, w1, b1, w2, b2, use_bf16=False))
    assert out_f32.shape == (B, N_OUT)
    assert jnp.allclose(out_f32, ref, atol=1e-5, rtol=1e-5)

    # bf16-input path (v6e/v7x traffic optimization): loose tolerance.
    out_bf16 = jax.block_until_ready(
        neural_network_year_venue(x, w1, b1, w2, b2, use_bf16=True))
    assert out_bf16.shape == (B, N_OUT)
    assert jnp.allclose(out_bf16, ref, atol=3e-2, rtol=3e-2)

    print("KERNEL_OK")
</pallas_src>

<mosaic_0001>
module attributes {stable_mosaic.version = 11 : i64} {
  func.func @_mlp_kernel(%arg0: i32, %arg1: memref<16x32xf32, #tpu.memory_space<vmem>>, %arg2: memref<32x128xf32, #tpu.memory_space<vmem>>, %arg3: memref<1x128xf32, #tpu.memory_space<vmem>>, %arg4: memref<128x128xf32, #tpu.memory_space<vmem>>, %arg5: memref<1x128xf32, #tpu.memory_space<vmem>>, %arg6: memref<16x128xf32, #tpu.memory_space<vmem>>) attributes {dimension_semantics = [#tpu.dimension_semantics<parallel>], iteration_bounds = array<i64: 1>, scalar_prefetch = 0 : i64, scratch_operands = 0 : i64, tpu.core_type = #tpu.core_type<tc>, window_params = [{transform_indices = @transform_0, window_bounds = array<i64: 16, 32>}, {pipeline_mode = #tpu.pipeline_mode<synchronous>, transform_indices = @transform_1, window_bounds = array<i64: 32, 128>}, {pipeline_mode = #tpu.pipeline_mode<synchronous>, transform_indices = @transform_2, window_bounds = array<i64: 1, 128>}, {pipeline_mode = #tpu.pipeline_mode<synchronous>, transform_indices = @transform_3, window_bounds = array<i64: 128, 128>}, {pipeline_mode = #tpu.pipeline_mode<synchronous>, transform_indices = @transform_4, window_bounds = array<i64: 1, 128>}, {transform_indices = @transform_5, window_bounds = array<i64: 16, 128>}]} {
    %c0 = arith.constant 0 : index
    %c0_0 = arith.constant 0 : index
    %0 = vector.load %arg1[%c0, %c0_0] : memref<16x32xf32, #tpu.memory_space<vmem>>, vector<16x32xf32>
    %c0_1 = arith.constant 0 : index
    %c0_2 = arith.constant 0 : index
    %1 = vector.load %arg2[%c0_1, %c0_2] : memref<32x128xf32, #tpu.memory_space<vmem>>, vector<32x128xf32>
    %cst = arith.constant dense<0.000000e+00> : vector<16x128xf32>
    %2 = tpu.matmul %0, %1, %cst {dimension_numbers = #tpu.dot_dimension_numbers<[1], [0], [0], [1], [0, 0, 1, 1], [], []>} : vector<16x32xf32>, vector<32x128xf32>, vector<16x128xf32> -> vector<16x128xf32>
    %c0_3 = arith.constant 0 : index
    %c0_4 = arith.constant 0 : index
    %3 = vector.load %arg3[%c0_3, %c0_4] : memref<1x128xf32, #tpu.memory_space<vmem>>, vector<1x128xf32>
    %4 = vector.broadcast %3 : vector<1x128xf32> to vector<16x128xf32>
    %5 = arith.addf %2, %4 : vector<16x128xf32>
    %cst_5 = arith.constant 0.000000e+00 : f32
    %6 = vector.broadcast %cst_5 : f32 to vector<16x128xf32>
    %7 = arith.maximumf %5, %6 : vector<16x128xf32>
    %c0_6 = arith.constant 0 : index
    %c0_7 = arith.constant 0 : index
    %8 = vector.load %arg4[%c0_6, %c0_7] : memref<128x128xf32, #tpu.memory_space<vmem>>, vector<128x128xf32>
    %cst_8 = arith.constant dense<0.000000e+00> : vector<16x128xf32>
    %9 = tpu.matmul %7, %8, %cst_8 {dimension_numbers = #tpu.dot_dimension_numbers<[1], [0], [0], [1], [0, 0, 1, 1], [], []>} : vector<16x128xf32>, vector<128x128xf32>, vector<16x128xf32> -> vector<16x128xf32>
    %c0_9 = arith.constant 0 : index
    %c0_10 = arith.constant 0 : index
    %10 = vector.load %arg5[%c0_9, %c0_10] : memref<1x128xf32, #tpu.memory_space<vmem>>, vector<1x128xf32>
    %11 = vector.broadcast %10 : vector<1x128xf32> to vector<16x128xf32>
    %12 = arith.addf %9, %11 : vector<16x128xf32>
    %13 = arith.negf %12 : vector<16x128xf32>
    %14 = math.exp %13 : vector<16x128xf32>
    %cst_11 = arith.constant 1.000000e+00 : f32
    %15 = vector.broadcast %cst_11 : f32 to vector<16x128xf32>
    %16 = arith.addf %15, %14 : vector<16x128xf32>
    %17 = arith.divf %15, %16 : vector<16x128xf32>
    %c0_12 = arith.constant 0 : index
    %c0_13 = arith.constant 0 : index
    %18 = vector.load %arg6[%c0_12, %c0_13] : memref<16x128xf32, #tpu.memory_space<vmem>>, vector<16x128xf32>
    tpu.vector_store %arg6[%c0_12, %c0_13], %17 {strides = array<i32>} : memref<16x128xf32, #tpu.memory_space<vmem>>, vector<16x128xf32>,
    return
  }
  func.func @transform_0(%arg0: i32) -> (i32, i32) {
    %c0_i32 = arith.constant 0 : i32
    %c0_i32_0 = arith.constant 0 : i32
    return %arg0, %c0_i32 : i32, i32
  }
  func.func @transform_1(%arg0: i32) -> (i32, i32) {
    %c0_i32 = arith.constant 0 : i32
    %c0_i32_0 = arith.constant 0 : i32
    %c0_i32_1 = arith.constant 0 : i32
    return %c0_i32, %c0_i32_0 : i32, i32
  }
  func.func @transform_2(%arg0: i32) -> (i32, i32) {
    %c0_i32 = arith.constant 0 : i32
    %c0_i32_0 = arith.constant 0 : i32
    %c0_i32_1 = arith.constant 0 : i32
    return %c0_i32, %c0_i32_0 : i32, i32
  }
  func.func @transform_3(%arg0: i32) -> (i32, i32) {
    %c0_i32 = arith.constant 0 : i32
    %c0_i32_0 = arith.constant 0 : i32
    %c0_i32_1 = arith.constant 0 : i32
    return %c0_i32, %c0_i32_0 : i32, i32
  }
  func.func @transform_4(%arg0: i32) -> (i32, i32) {
    %c0_i32 = arith.constant 0 : i32
    %c0_i32_0 = arith.constant 0 : i32
    %c0_i32_1 = arith.constant 0 : i32
    return %c0_i32, %c0_i32_0 : i32, i32
  }
  func.func @transform_5(%arg0: i32) -> (i32, i32) {
    %c0_i32 = arith.constant 0 : i32
    %c0_i32_0 = arith.constant 0 : i32
    return %arg0, %c0_i32 : i32, i32
  }
}

</mosaic_0001>

<llo_original>
// kernel: neural_network_year_venue.1
$region0: #{neural_network_year_venue.1}
  #allocation0 [shape = 'u32[]', space=smem, size = 0x4, offset = 0x4, fixed_abs, tag = 'smem constant byte address 0x4 - core index']
  #allocation1 [shape = 'u32[144,128]{1,0:T(1,128)}', space=vmem, size = 0x12000, scoped, tag = 'internal scratch']
  %s0 = inlined_call_operand.vmem [shape: f32[16,32], index: 0, kind: input, shape index: {}]
  %s1 = inlined_call_operand.vmem [shape: f32[32,128], index: 1, kind: input, shape index: {}]
  %s2 = inlined_call_operand.vmem [shape: f32[1,128], index: 2, kind: input, shape index: {}]
  %s3 = inlined_call_operand.vmem [shape: f32[128,128], index: 3, kind: input, shape index: {}]
  %s4 = inlined_call_operand.vmem [shape: f32[1,128], index: 4, kind: input, shape index: {}]
  %s5 = inlined_call_operand.vmem [shape: f32[16,128], index: 5, kind: output, shape index: {}]
  %s6 = sld [smem:[#allocation0]]
  $region30: #{neural_network_year_venue.1} parent=0
    _
  %s8 = ssub.s32 1, %s6
  %s9 = scalar_select 0, %s8, %s6
  // Predicated region
  $region2: #{neural_network_year_venue.1} parent=0 // pred_check
    _
  $region3: #{neural_network_year_venue.1} parent=0 // pred_check_branch
    %11 = sbr.rel (0) target = $region5
  $region4: #{neural_network_year_venue.1} parent=0 // pred_region
    _
  $region5: #{neural_network_year_venue.1} parent=0 // pred_fallthru
    _
  // Predicated region
  $region6: #{neural_network_year_venue.1} parent=0 // pred_check
    _
  $region7: #{neural_network_year_venue.1} parent=0 // pred_check_branch
    %13 = sbr.rel (0) target = $region9
  $region8: #{neural_network_year_venue.1} parent=0 // pred_region
    _
  $region9: #{neural_network_year_venue.1} parent=0 // pred_fallthru
    _
  // Predicated region
  $region10: #{neural_network_year_venue.1} parent=0 // pred_check
    _
  $region11: #{neural_network_year_venue.1} parent=0 // pred_check_branch
    %15 = sbr.rel (0) target = $region13
  $region12: #{neural_network_year_venue.1} parent=0 // pred_region
    _
  $region13: #{neural_network_year_venue.1} parent=0 // pred_fallthru
    _
  // Predicated region
  $region14: #{neural_network_year_venue.1} parent=0 // pred_check
    _
  $region15: #{neural_network_year_venue.1} parent=0 // pred_check_branch
    %17 = sbr.rel (0) target = $region17
  $region16: #{neural_network_year_venue.1} parent=0 // pred_region
    _
  $region17: #{neural_network_year_venue.1} parent=0 // pred_fallthru
    _
  // Predicated region
  $region18: #{neural_network_year_venue.1} parent=0 // pred_check
    _
  $region19: #{neural_network_year_venue.1} parent=0 // pred_check_branch
    %19 = sbr.rel (0) target = $region21
  $region20: #{neural_network_year_venue.1} parent=0 // pred_region
    _
  $region21: #{neural_network_year_venue.1} parent=0 // pred_fallthru
    _
  %v20 = vld [vmem:[%s0] sm:$0xff]
  %v21 = vld [vmem:[%s0 + $0x8] sm:$0xff]
  %v22 = vld [vmem:[%s1] sm:$0xff]
  %v23 = vld [vmem:[%s1 + $0x8] sm:$0xff]
  %v24 = vld [vmem:[%s1 + $0x10] sm:$0xff]
  %v25 = vld [vmem:[%s1 + $0x18] sm:$0xff]
  %v26 = vld [vmem:[%s2] sm:$0x1]
  %v28 = vlaneseq
  %v29 = vshrl.u32 %v28, 7
  %v30 = vsub.s32 0, %v29
  %v31 = vrot.slane %v26, %v30
  %vm33 = vcmask 261120
  %v35 = vsel %vm33, %v20, 0
  %v38 = vsel %vm33, %v21, 0
  %40 = vmatprep.subr.mxu0 0.0
  %41 = vmatpush1.msra.mxu0 %v22
  %42 = vmatprep.subr.mxu0 0.0
  %43 = vmatpush1.msra.mxu0 %v23
  %44 = vmatprep.subr.mxu0 0.0
  %45 = vmatpush1.msra.mxu0 %v24
  %46 = vmatprep.subr.mxu0 0.0
  %47 = vmatpush1.msra.mxu0 %v25
  %48 = vmatprep.subr.mxu0 0.0
  %49 = vmatpush1.msra.mxu0 0.0
  %50 = vmatprep.subr.mxu0 0.0
  %51 = vmatpush1.msra.mxu0 0.0
  %52 = vmatprep.subr.mxu0 0.0
  %53 = vmatpush1.msra.mxu0 0.0
  %54 = vmatprep.subr.mxu0 0.0
  %55 = vmatpush1.msra.mxu0 0.0
  %56 = vmatprep.subr.mxu0 0.0
  %57 = vmatpush1.msra.mxu0 0.0
  %58 = vmatprep.subr.mxu0 0.0
  %59 = vmatpush1.msra.mxu0 0.0
  %60 = vmatprep.subr.mxu0 0.0
  %61 = vmatpush1.msra.mxu0 0.0
  %62 = vmatprep.subr.mxu0 0.0
  %63 = vmatpush1.msra.mxu0 0.0
  %64 = vmatprep.subr.mxu0 0.0
  %65 = vmatpush1.msra.mxu0 0.0
  %66 = vmatprep.subr.mxu0 0.0
  %67 = vmatpush1.msra.mxu0 0.0
  %68 = vmatprep.subr.mxu0 0.0
  %69 = vmatpush1.msra.mxu0 0.0
  %70 = vmatprep.subr.mxu0 0.0
  %71 = vmatpush1.msra.mxu0 0.0
  %72 = vmatprep.subr.mxu0 0.0
  %73 = vmatpush1.msra.mxu0 0.0
  %74 = vmatprep.subr.mxu0 0.0
  %75 = vmatpush1.msra.mxu0 0.0
  %76 = vmatprep.subr.mxu0 0.0
  %77 = vmatpush1.msra.mxu0 0.0
  %78 = vmatprep.subr.mxu0 0.0
  %79 = vmatpush1.msra.mxu0 0.0
  %80 = vmatprep.subr.mxu0 0.0
  %81 = vmatpush1.msra.mxu0 0.0
  %82 = vmatprep.subr.mxu0 0.0
  %83 = vmatpush1.msra.mxu0 0.0
  %84 = vmatprep.subr.mxu0 0.0
  %85 = vmatpush1.msra.mxu0 0.0
  %86 = vmatprep.subr.mxu0 0.0
  %87 = vmatpush1.msra.mxu0 0.0
  %88 = vmatprep.subr.mxu0 0.0
  %89 = vmatpush1.msra.mxu0 0.0
  %90 = vmatprep.subr.mxu0 0.0
  %91 = vmatpush1.msra.mxu0 0.0
  %92 = vmatprep.subr.mxu0 0.0
  %93 = vmatpush1.msra.mxu0 0.0
  %94 = vmatprep.subr.mxu0 0.0
  %95 = vmatpush1.msra.mxu0 0.0
  %96 = vmatprep.subr.mxu0 0.0
  %97 = vmatpush1.msra.mxu0 0.0
  %98 = vmatprep.subr.mxu0 0.0
  %99 = vmatpush1.msra.mxu0 0.0
  %100 = vmatprep.subr.mxu0 0.0
  %101 = vmatpush1.msra.mxu0 0.0
  %102 = vmatprep.subr.mxu0 0.0
  %103 = vmatpush1.msra.mxu0 0.0
  %104 = vmatprep.mubr.f32.mxu0 0.0
  %105 = vmatmul.mubr.f32.gmra.mrb[0].mxu0 %v35
  %v106 = vpop.f32.mrb[0].mxu0
  %v107 = vadd.f32 %v31, %v106
  %v108 = vpop.f32.mrb[0].mxu0
  %109 = vmatprep.mubr.f32.mxu0 0.0
  %110 = vmatmul.mubr.f32.gmra.mrb[0].mxu0 %v38
  %v111 = vpop.f32.mrb[0].mxu0
  %v112 = vadd.f32 %v31, %v111
  %v113 = vpop.f32.mrb[0].mxu0
  %114 = vdwg.mxu0
  %v115 = vmax.f32 %v107, 0.0
  %v116 = vmax.f32 %v112, 0.0
  %v117 = vld [vmem:[%s3] sm:$0xff]
  %v118 = vld [vmem:[%s3 + $0x8] sm:$0xff]
  %v119 = vld [vmem:[%s3 + $0x10] sm:$0xff]
  %v120 = vld [vmem:[%s3 + $0x18] sm:$0xff]
  %v121 = vld [vmem:[%s3 + $0x20] sm:$0xff]
  %v122 = vld [vmem:[%s3 + $0x28] sm:$0xff]
  %v123 = vld [vmem:[%s3 + $0x30] sm:$0xff]
  %v124 = vld [vmem:[%s3 + $0x38] sm:$0xff]
  %v125 = vld [vmem:[%s3 + $0x40] sm:$0xff]
  %v126 = vld [vmem:[%s3 + $0x48] sm:$0xff]
  %v127 = vld [vmem:[%s3 + $0x50] sm:$0xff]
  %v128 = vld [vmem:[%s3 + $0x58] sm:$0xff]
  %v129 = vld [vmem:[%s3 + $0x60] sm:$0xff]
  %v130 = vld [vmem:[%s3 + $0x68] sm:$0xff]
  %v131 = vld [vmem:[%s3 + $0x70] sm:$0xff]
  %v132 = vld [vmem:[%s3 + $0x78] sm:$0xff]
  %v133 = vld [vmem:[%s4] sm:$0x1]
  %v135 = vlaneseq
  %v136 = vshrl.u32 %v135, 7
  %v137 = vsub.s32 0, %v136
  %v138 = vrot.slane %v133, %v137
  %140 = vmatprep.subr.mxu0 0.0
  %141 = vmatpush1.msra.mxu0 %v117
  %142 = vmatprep.subr.mxu0 0.0
  %143 = vmatpush1.msra.mxu0 %v118
  %144 = vmatprep.subr.mxu0 0.0
  %145 = vmatpush1.msra.mxu0 %v119
  %146 = vmatprep.subr.mxu0 0.0
  %147 = vmatpush1.msra.mxu0 %v120
  %148 = vmatprep.subr.mxu0 0.0
  %149 = vmatpush1.msra.mxu0 %v121
  %150 = vmatprep.subr.mxu0 0.0
  %151 = vmatpush1.msra.mxu0 %v122
  %152 = vmatprep.subr.mxu0 0.0
  %153 = vmatpush1.msra.mxu0 %v123
  %154 = vmatprep.subr.mxu0 0.0
  %155 = vmatpush1.msra.mxu0 %v124
  %156 = vmatprep.subr.mxu0 0.0
  %157 = vmatpush1.msra.mxu0 %v125
  %158 = vmatprep.subr.mxu0 0.0
  %159 = vmatpush1.msra.mxu0 %v126
  %160 = vmatprep.subr.mxu0 0.0
  %161 = vmatpush1.msra.mxu0 %v127
  %162 = vmatprep.subr.mxu0 0.0
  %163 = vmatpush1.msra.mxu0 %v128
  %164 = vmatprep.subr.mxu0 0.0
  %165 = vmatpush1.msra.mxu0 %v129
  %166 = vmatprep.subr.mxu0 0.0
  %167 = vmatpush1.msra.mxu0 %v130
  %168 = vmatprep.subr.mxu0 0.0
  %169 = vmatpush1.msra.mxu0 %v131
  %170 = vmatprep.subr.mxu0 0.0
  %171 = vmatpush1.msra.mxu0 %v132
  %172 = vmatprep.subr.mxu0 0.0
  %173 = vmatpush1.msra.mxu0 0.0
  %174 = vmatprep.subr.mxu0 0.0
  %175 = vmatpush1.msra.mxu0 0.0
  %176 = vmatprep.subr.mxu0 0.0
  %177 = vmatpush1.msra.mxu0 0.0
  %178 = vmatprep.subr.mxu0 0.0
  %179 = vmatpush1.msra.mxu0 0.0
  %180 = vmatprep.subr.mxu0 0.0
  %181 = vmatpush1.msra.mxu0 0.0
  %182 = vmatprep.subr.mxu0 0.0
  %183 = vmatpush1.msra.mxu0 0.0
  %184 = vmatprep.subr.mxu0 0.0
  %185 = vmatpush1.msra.mxu0 0.0
  %186 = vmatprep.subr.mxu0 0.0
  %187 = vmatpush1.msra.mxu0 0.0
  %188 = vmatprep.subr.mxu0 0.0
  %189 = vmatpush1.msra.mxu0 0.0
  %190 = vmatprep.subr.mxu0 0.0
  %191 = vmatpush1.msra.mxu0 0.0
  %192 = vmatprep.subr.mxu0 0.0
  %193 = vmatpush1.msra.mxu0 0.0
  %194 = vmatprep.subr.mxu0 0.0
  %195 = vmatpush1.msra.mxu0 0.0
  %196 = vmatprep.subr.mxu0 0.0
  %197 = vmatpush1.msra.mxu0 0.0
  %198 = vmatprep.subr.mxu0 0.0
  %199 = vmatpush1.msra.mxu0 0.0
  %200 = vmatprep.subr.mxu0 0.0
  %201 = vmatpush1.msra.mxu0 0.0
  %202 = vmatprep.subr.mxu0 0.0
  %203 = vmatpush1.msra.mxu0 0.0
  %204 = vmatprep.mubr.f32.mxu0 0.0
  %205 = vmatmul.mubr.f32.gmra.mrb[0].mxu0 %v115
  %v206 = vpop.f32.mrb[0].mxu0
  %v207 = vadd.f32 %v138, %v206
  %v208 = vpop.f32.mrb[0].mxu0
  %209 = vmatprep.mubr.f32.mxu0 0.0
  %210 = vmatmul.mubr.f32.gmra.mrb[0].mxu0 %v116
  %v211 = vpop.f32.mrb[0].mxu0
  %v212 = vadd.f32 %v138, %v211
  %v213 = vpop.f32.mrb[0].mxu0
  %214 = vdwg.mxu0
  %v215 = vxor.u32 %v207, 2147483648
  %v216 = vxor.u32 %v212, 2147483648
  %v217 = vmul.f32 %v215, 1.442695
  %v218 = vpow.pop %v217
  %v219 = vmul.f32 %v216, 1.442695
  %v220 = vpow.pop %v219
  %v221 = vadd.f32 %v218, 1.0
  %v222 = vadd.f32 %v220, 1.0
  %v223 = vrcp.pop %v221
  %v224 = vmul.f32 1.0, %v223
  %v225 = vrcp.pop %v222
  %v226 = vmul.f32 1.0, %v225
  %227 = vst [vmem:[%s5] sm:$0xff] %v224
  %228 = vst [vmem:[%s5 + $0x8] sm:$0xff] %v226
  // Predicated region
  $region22: #{neural_network_year_venue.1} parent=0 // pred_check
    _
  $region23: #{neural_network_year_venue.1} parent=0 // pred_check_branch
    %230 = sbr.rel (0) target = $region25
  $region24: #{neural_network_year_venue.1} parent=0 // pred_region
    _
  $region25: #{neural_network_year_venue.1} parent=0 // pred_fallthru
    _
  // Predicated region
  $region26: #{neural_network_year_venue.1} parent=0 // pred_check
    _
  $region27: #{neural_network_year_venue.1} parent=0 // pred_check_branch
    %232 = sbr.rel (0) target = $region29
  $region28: #{neural_network_year_venue.1} parent=0 // pred_region
    _
  $region29: #{neural_network_year_venue.1} parent=0 // pred_fallthru
    _

</llo_original>
